<compile_context>
chip_gen: v5e
topology: v5e:2x2
jax: 0.10.0
libtpu: 0.0.40
codegen_flags: <defaults>
</compile_context>

<pallas_src>
import math
import functools

import jax
import jax.numpy as jnp
from jax.experimental import pallas as pl
from jax.experimental.pallas import tpu as pltpu

SQRT2 = math.sqrt(2.0)
RGBP = 8                      # RGB carried padded to 8 channels (bf16) until the end
_HAS_PRNG = hasattr(pltpu, "prng_seed") and hasattr(pltpu, "stateful_normal")


def _round_up(x, m):
    return (x + m - 1) // m * m


def _ctile(n):
    """Channel tile: tile only when lane-dense (multiple of 128), else full dim."""
    if n % 256 == 0:
        return 256
    if n % 128 == 0:
        return 128
    return n


def _block_bytes(shape, dtype):
    """VMEM footprint of one block, accounting for (8,128) lane/sublane padding."""
    shape = tuple(int(d) for d in shape)
    if not shape:
        return 4
    lane = _round_up(shape[-1], 128)
    sub = _round_up(shape[-2], 8) if len(shape) >= 2 else 1
    outer = 1
    for d in shape[:-2]:
        outer *= d
    return outer * sub * lane * jnp.dtype(dtype).itemsize


def _vmem_cap_bytes():
    try:
        info = pltpu.get_tpu_info()
        return int(getattr(info, "vmem_capacity_bytes", 64 * 1024 * 1024))
    except Exception:
        return 64 * 1024 * 1024


def _vmem_limit(blocks):
    """Per-call scoped-VMEM cap from the actual per-step block sizes."""
    total = sum(_block_bytes(s, d) for s, d in blocks)
    cap = _vmem_cap_bytes() - 4 * 1024 * 1024
    return int(min(cap, max(32 * 1024 * 1024, 3 * total)))


# --------------------------------------------------------------------------
# Pallas kernel 1: tiled matmul + bias + optional FusedLeakyReLU
# --------------------------------------------------------------------------

def _matmul_kernel(x_ref, w_ref, b_ref, o_ref, acc_ref, *, activate):
    @pl.when(pl.program_id(2) == 0)
    def _():
        acc_ref[...] = jnp.zeros_like(acc_ref)

    acc_ref[...] += jnp.dot(x_ref[...], w_ref[...],
                            preferred_element_type=jnp.float32)

    @pl.when(pl.program_id(2) == pl.num_programs(2) - 1)
    def _():
        y = acc_ref[...] + b_ref[...]
        if activate:
            y = jnp.where(y >= 0.0, y, 0.2 * y) * SQRT2
        o_ref[...] = y.astype(o_ref.dtype)


def _matmul_kernel_single_k(x_ref, w_ref, b_ref, o_ref, *, activate):
    # K fits in one tile: no scratch accumulator, no pl.when init/finalize.
    y = jnp.dot(x_ref[...], w_ref[...], preferred_element_type=jnp.float32)
    y = y + b_ref[...]
    if activate:
        y = jnp.where(y >= 0.0, y, 0.2 * y) * SQRT2
    o_ref[...] = y.astype(o_ref.dtype)


def matmul_bias_act(x, w, b, *, activate, out_dtype=jnp.float32,
                    tm=256, tn=256, tk=512):
    """y = [fused_lrelu](x @ w + b).  x:(M,K)  w:(K,N)  b:(N,).  bf16 MXU, f32 acc."""
    M, K = x.shape
    K2, N = w.shape
    assert K2 == K

    tm = min(tm, _round_up(M, 16))          # 16: bf16 sublane packing
    tn = min(tn, _round_up(N, 128))
    tk = min(tk, _round_up(K, 128))
    Mp, Np, Kp = _round_up(M, tm), _round_up(N, tn), _round_up(K, tk)

    xb = x.astype(jnp.bfloat16)
    wb = w.astype(jnp.bfloat16)
    if (Mp, Kp) != (M, K):
        xb = jnp.pad(xb, ((0, Mp - M), (0, Kp - K)))
    if (Kp, Np) != (K, N):
        wb = jnp.pad(wb, ((0, Kp - K), (0, Np - N)))
    bb = b.reshape(1, N).astype(jnp.float32)
    if Np != N:
        bb = jnp.pad(bb, ((0, 0), (0, Np - N)))

    cost = pl.CostEstimate(
        flops=int(2 * Mp * Np * Kp), transcendentals=0,
        bytes_accessed=int(2 * (Mp * Kp + Kp * Np) + 4 * Mp * Np))

    if Kp == tk:
        blocks = [((tm, tk), jnp.bfloat16), ((tk, tn), jnp.bfloat16),
                  ((1, tn), jnp.float32), ((tm, tn), out_dtype)]
        out = pl.pallas_call(
            functools.partial(_matmul_kernel_single_k, activate=activate),
            out_shape=jax.ShapeDtypeStruct((Mp, Np), out_dtype),
            grid=(Mp // tm, Np // tn),
            in_specs=[pl.BlockSpec((tm, tk), lambda i, j: (i, 0)),
                      pl.BlockSpec((tk, tn), lambda i, j: (0, j)),
                      pl.BlockSpec((1, tn), lambda i, j: (0, j))],
            out_specs=pl.BlockSpec((tm, tn), lambda i, j: (i, j)),
            compiler_params=pltpu.CompilerParams(
                dimension_semantics=("parallel", "parallel"),
                vmem_limit_bytes=_vmem_limit(blocks)),
            cost_estimate=cost,
        )(xb, wb, bb)
    else:
        blocks = [((tm, tk), jnp.bfloat16), ((tk, tn), jnp.bfloat16),
                  ((1, tn), jnp.float32), ((tm, tn), out_dtype),
                  ((tm, tn), jnp.float32)]
        out = pl.pallas_call(
            functools.partial(_matmul_kernel, activate=activate),
            out_shape=jax.ShapeDtypeStruct((Mp, Np), out_dtype),
            grid=(Mp // tm, Np // tn, Kp // tk),
            in_specs=[pl.BlockSpec((tm, tk), lambda i, j, k: (i, k)),
                      pl.BlockSpec((tk, tn), lambda i, j, k: (k, j)),
                      pl.BlockSpec((1, tn), lambda i, j, k: (0, j))],
            out_specs=pl.BlockSpec((tm, tn), lambda i, j, k: (i, j)),
            scratch_shapes=[pltpu.VMEM((tm, tn), jnp.float32)],
            compiler_params=pltpu.CompilerParams(
                dimension_semantics=("parallel", "parallel", "arbitrary"),
                vmem_limit_bytes=_vmem_limit(blocks)),
            cost_estimate=cost,
        )(xb, wb, bb)

    if (Mp, Np) != (M, N):
        out = out[:M, :N]
    return out


# --------------------------------------------------------------------------
# Pallas kernel 2: modulated conv (im2col-free) with fused epilogue
# --------------------------------------------------------------------------

def _make_mod_conv_kernel(ksize, use_demod, noise_mode, use_bias, use_res, activate):
    def kernel(*refs):
        it = iter(refs)
        x_ref = next(it)                        # (1, Hp, Wp, IC)  padded input, bf16
        w_ref = next(it)                        # (k*k, IC, OCt)   scale folded, bf16
        st_ref = next(it)                       # (1, IC, 1)       per-sample style
        dm_ref = next(it) if use_demod else None        # (1, OCt)
        if noise_mode == "prng":
            seed_ref = next(it)                 # (1,) int32 in SMEM
            nw_ref = next(it)                   # (1,) f32   in SMEM
        elif noise_mode == "hbm":
            nz_ref = next(it)                   # (1, Ho, Wo, 1)
        b_ref = next(it) if use_bias else None          # (1, OCt)
        r_ref = next(it) if use_res else None           # (1, Ho, Wo, OCt)  skip
        o_ref = next(it)                        # (1, Ho, Wo, OCt)

        Hp, Wp, IC = x_ref.shape[1], x_ref.shape[2], x_ref.shape[3]
        Ho, Wo, OCt = o_ref.shape[1], o_ref.shape[2], o_ref.shape[3]

        # Fold per-sample style (K axis) and demodulation (N axis) into the SMALL
        # weight tile in f32 (k*k*IC*OCt elems); the big activation block stays
        # untouched bf16 (no full-map upcast/multiply/downcast pass).
        w = w_ref[...].astype(jnp.float32) * st_ref[0][None, :, :]
        if use_demod:
            w = w * dm_ref[...][None]
        w = w.astype(jnp.bfloat16)

        x = x_ref[0]                                   # (Hp, Wp, IC) bf16
        # Hoist the ksize column-shifted views and flatten each ONCE (ksize relayouts
        # instead of k*k); per-tap row windows become contiguous leading-dim slices.
        cols = [x[:, kw:kw + Wo, :].reshape(Hp * Wo, IC) for kw in range(ksize)]

        acc = jnp.zeros((Ho * Wo, OCt), jnp.float32)
        for kh in range(ksize):
            for kw in range(ksize):
                patch = cols[kw][kh * Wo:kh * Wo + Ho * Wo, :]
                acc = acc + jnp.dot(patch, w[kh * ksize + kw],
                                    preferred_element_type=jnp.float32)

        y = acc.reshape(Ho, Wo, OCt)
        if noise_mode == "prng":
            # same seed for every OC tile of a sample -> identical noise per channel
            pltpu.prng_seed(seed_ref[0] + pl.program_id(0))
            y = y + nw_ref[0] * pltpu.stateful_normal((Ho, Wo, 1), jnp.float32)
        elif noise_mode == "hbm":
            y = y + nz_ref[0].astype(jnp.float32)
        if use_bias:
            y = y + b_ref[...].astype(jnp.float32)
        if activate:
            y = jnp.where(y >= 0.0, y, 0.2 * y) * SQRT2
        if use_res:
            y = y + r_ref[0].astype(jnp.float32)
        o_ref[...] = y[None].astype(o_ref.dtype)
    return kernel


def mod_conv2d(xp, w, style_t, *, ksize, demod=None, noise_mode=None, seed=None,
               noise_w=None, noise=None, bias=None, residual=None, activate=False,
               out_dtype=jnp.bfloat16):
    """Modulated conv on an already spatially padded NHWC input.

    xp: (B, Hp, Wp, IC), w: (k*k, IC, OC), style_t: (B, IC, 1), demod: (B, OC).
    Output: (B, Hp-k+1, Wp-k+1, OC).
    """
    B, Hp, Wp, IC = xp.shape
    kk, IC2, OC = w.shape
    assert kk == ksize * ksize and IC2 == IC
    Ho, Wo = Hp - (ksize - 1), Wp - (ksize - 1)

    t_oc = _ctile(OC)
    grid = (B, OC // t_oc)

    inputs = [xp.astype(jnp.bfloat16), w.astype(jnp.bfloat16),
              style_t.astype(jnp.float32)]
    in_specs = [
        pl.BlockSpec((1, Hp, Wp, IC), lambda b, c: (b, 0, 0, 0)),
        pl.BlockSpec((kk, IC, t_oc), lambda b, c: (0, 0, c)),
        pl.BlockSpec((1, IC, 1), lambda b, c: (b, 0, 0)),
    ]
    blocks = [((1, Hp, Wp, IC), jnp.bfloat16), ((kk, IC, t_oc), jnp.bfloat16),
              ((1, IC, 1), jnp.float32), ((1, Ho, Wo, t_oc), out_dtype),
              ((Ho * Wo, t_oc), jnp.float32),                 # f32 accumulator
              ((ksize * Hp * Wo, IC), jnp.bfloat16)]          # hoisted column views
    if demod is not None:
        inputs.append(demod.astype(jnp.float32))
        in_specs.append(pl.BlockSpec((1, t_oc), lambda b, c: (b, c)))
    if noise_mode == "prng":
        inputs.append(seed)
        in_specs.append(pl.BlockSpec(memory_space=pltpu.MemorySpace.SMEM))
        inputs.append(noise_w)
        in_specs.append(pl.BlockSpec(memory_space=pltpu.MemorySpace.SMEM))
    elif noise_mode == "hbm":
        inputs.append(noise.astype(jnp.float32))
        in_specs.append(pl.BlockSpec((1, Ho, Wo, 1), lambda b, c: (b, 0, 0, 0)))
        blocks.append(((1, Ho, Wo, 1), jnp.float32))
    if bias is not None:
        inputs.append(bias.reshape(1, OC).astype(jnp.float32))
        in_specs.append(pl.BlockSpec((1, t_oc), lambda b, c: (0, c)))
    if residual is not None:
        inputs.append(residual)
        in_specs.append(pl.BlockSpec((1, Ho, Wo, t_oc), lambda b, c: (b, 0, 0, c)))
        blocks.append(((1, Ho, Wo, t_oc), residual.dtype))

    kernel = _make_mod_conv_kernel(ksize, demod is not None, noise_mode,
                                   bias is not None, residual is not None, activate)
    # TODO(synk): for feature maps >=128x128 add output-row tiling with a (ksize-1)
    # halo (keeps the block inside v7x's 64 MiB VMEM and gives its 2 TensorCores a
    # parallel axis when B=1); at the sizes exercised here one block fits comfortably.
    return pl.pallas_call(
        kernel,
        out_shape=jax.ShapeDtypeStruct((B, Ho, Wo, OC), out_dtype),
        grid=grid,
        in_specs=in_specs,
        out_specs=pl.BlockSpec((1, Ho, Wo, t_oc), lambda b, c: (b, 0, 0, c)),
        compiler_params=pltpu.CompilerParams(
            dimension_semantics=("parallel", "parallel"),
            vmem_limit_bytes=_vmem_limit(blocks)),
        cost_estimate=pl.CostEstimate(
            flops=int(2 * B * Ho * Wo * OC * IC * ksize * ksize),
            transcendentals=0,
            bytes_accessed=int(2 * (xp.size + w.size + B * Ho * Wo * OC))),
    )(*inputs)


# --------------------------------------------------------------------------
# Pallas kernel 3: separable [1,3,3,1] blur (upfirdn2d) with fused epilogue
# --------------------------------------------------------------------------

def _make_blur_kernel(taps_h, taps_v, noise_mode, use_bias, activate):
    def kernel(*refs):
        it = iter(refs)
        x_ref = next(it)                        # (1, Hp, Wp, Ct)  padded input, bf16
        if noise_mode == "prng":
            seed_ref = next(it)
            nw_ref = next(it)
        elif noise_mode == "hbm":
            nz_ref = next(it)
        b_ref = next(it) if use_bias else None
        o_ref = next(it)                        # (1, Ho, Wo, Ct)

        Ho, Wo = o_ref.shape[1], o_ref.shape[2]
        x = x_ref[0]                            # bf16: halves vld bytes + VALU work
        # horizontal pass in the input dtype, vertical accumulation in f32
        t = taps_h[0] * x[:, 0:Wo, :]
        for j in range(1, 4):
            t = t + taps_h[j] * x[:, j:j + Wo, :]
        y = taps_v[0] * t[0:Ho].astype(jnp.float32)
        for i in range(1, 4):
            y = y + taps_v[i] * t[i:i + Ho].astype(jnp.float32)

        if noise_mode == "prng":
            pltpu.prng_seed(seed_ref[0] + pl.program_id(0))
            y = y + nw_ref[0] * pltpu.stateful_normal((Ho, Wo, 1), jnp.float32)
        elif noise_mode == "hbm":
            y = y + nz_ref[0].astype(jnp.float32)
        if use_bias:
            y = y + b_ref[...].astype(jnp.float32)
        if activate:
            y = jnp.where(y >= 0.0, y, 0.2 * y) * SQRT2
        o_ref[...] = y[None].astype(o_ref.dtype)
    return kernel


def blur4(xp, *, gain=1.0, noise_mode=None, seed=None, noise_w=None, noise=None,
          bias=None, activate=False, out_dtype=jnp.bfloat16):
    """Valid 4x4 [1,3,3,1]x[1,3,3,1]/64 * gain blur on an already padded NHWC input."""
    B, Hp, Wp, C = xp.shape
    Ho, Wo = Hp - 3, Wp - 3
    tc = _ctile(C)
    grid = (B, C // tc)

    taps_h = tuple(v / 8.0 for v in (1.0, 3.0, 3.0, 1.0))
    taps_v = tuple(v * float(gain) for v in taps_h)

    inputs = [xp.astype(jnp.bfloat16)]
    in_specs = [pl.BlockSpec((1, Hp, Wp, tc), lambda b, c: (b, 0, 0, c))]
    blocks = [((1, Hp, Wp, tc), jnp.bfloat16), ((1, Ho, Wo, tc), out_dtype),
              ((1, Ho, Wo, tc), jnp.float32)]
    if noise_mode == "prng":
        inputs.append(seed)
        in_specs.append(pl.BlockSpec(memory_space=pltpu.MemorySpace.SMEM))
        inputs.append(noise_w)
        in_specs.append(pl.BlockSpec(memory_space=pltpu.MemorySpace.SMEM))
    elif noise_mode == "hbm":
        inputs.append(noise.astype(jnp.float32))
        in_specs.append(pl.BlockSpec((1, Ho, Wo, 1), lambda b, c: (b, 0, 0, 0)))
        blocks.append(((1, Ho, Wo, 1), jnp.float32))
    if bias is not None:
        inputs.append(bias.reshape(1, C).astype(jnp.float32))
        in_specs.append(pl.BlockSpec((1, tc), lambda b, c: (0, c)))

    kernel = _make_blur_kernel(taps_h, taps_v, noise_mode, bias is not None, activate)
    return pl.pallas_call(
        kernel,
        out_shape=jax.ShapeDtypeStruct((B, Ho, Wo, C), out_dtype),
        grid=grid,
        in_specs=in_specs,
        out_specs=pl.BlockSpec((1, Ho, Wo, tc), lambda b, c: (b, 0, 0, c)),
        compiler_params=pltpu.CompilerParams(
            dimension_semantics=("parallel", "parallel"),
            vmem_limit_bytes=_vmem_limit(blocks)),
    )(*inputs)


# --------------------------------------------------------------------------
# StyleGAN2 generator building blocks (JAX glue around the kernels)
# --------------------------------------------------------------------------

def _upsample2_zeros(x):
    """Zero-insertion 2x upsample (NHWC): samples at even positions, zeros elsewhere."""
    # TODO(synk): replace with a polyphase transposed conv fused into the conv/blur
    # kernels (4 phase outputs from the un-upsampled input) to avoid the 4x
    # zero-stuffed intermediate and the wasted MXU work on zero samples.
    B, H, W, C = x.shape
    z = jnp.zeros((B, H, 2, W, 2, C), x.dtype)
    z = z.at[:, :, 0, :, 0, :].set(x)
    return z.reshape(B, 2 * H, 2 * W, C)


def mapping_network(z, mlayers):
    """PixelNorm + N x EqualLinear(fused_lrelu): z -> w."""
    # TODO(synk): for tiny batches the whole MLP could run in one kernel looping
    # layers in-VMEM; kept as per-layer matmuls for clarity.
    x = z.astype(jnp.float32)
    x = x * jax.lax.rsqrt(jnp.mean(x * x, axis=-1, keepdims=True) + 1e-8)
    for layer in mlayers:
        x = matmul_bias_act(x, layer['w'], layer['b'], activate=True,
                            out_dtype=jnp.float32)
    return x


def styled_conv(x, p, style, noise_ref, upsample, noise_mode):
    """StyledConv = ModulatedConv2d(+upsample/blur) + NoiseInjection + FusedLeakyReLU.

    `style` is the already-computed (B, IC) modulation vector (batched matmul).
    `noise_ref` is a (1,) int32 seed in prng mode, else a PRNG key.
    """
    B, H, W, IC = x.shape
    # demod[b,oc] = rsqrt(sum_ic style^2 * sum_kk (scale*w)^2 + 1e-8): tiny (B,OC) op
    demod = jax.lax.rsqrt(jnp.matmul(style * style, p['wsq']) + 1e-8)
    style_t = style[:, :, None]                                   # (B, IC, 1)

    Ho = 2 * H if upsample else H
    Wo = 2 * W if upsample else W
    if noise_mode == "prng":
        seed, nw, noise = noise_ref, p['noise_w'].reshape(1).astype(jnp.float32), None
    else:
        seed = nw = None
        noise = p['noise_w'] * jax.random.normal(noise_ref, (B, Ho, Wo, 1), jnp.float32)

    # TODO(synk): the jnp.pad calls below are extra HBM round-trips; move border
    # handling into the kernels (masked taps / offset index_map) at high resolutions.
    if upsample:
        # conv_transpose2d(stride=2) == zero-insert + conv with the pre-flipped weight
        xu = _upsample2_zeros(x)
        xp_ = jnp.pad(xu, ((0, 0), (2, 1), (2, 1), (0, 0)))
        y = mod_conv2d(xp_, p['w'], style_t, ksize=3, demod=demod,
                       out_dtype=jnp.bfloat16)                    # (B, 2H+1, 2W+1, OC)
        yp = jnp.pad(y, ((0, 0), (1, 1), (1, 1), (0, 0)))
        # blur (kernel * up^2, pad (1,1)) with noise + bias + lrelu fused in
        return blur4(yp, gain=4.0, noise_mode=noise_mode, seed=seed, noise_w=nw,
                     noise=noise, bias=p['act_bias'], activate=True,
                     out_dtype=jnp.bfloat16)                      # (B, 2H, 2W, OC)
    else:
        xp_ = jnp.pad(x, ((0, 0), (1, 1), (1, 1), (0, 0)))
        return mod_conv2d(xp_, p['w'], style_t, ksize=3, demod=demod,
                          noise_mode=noise_mode, seed=seed, noise_w=nw, noise=noise,
                          bias=p['act_bias'], activate=True, out_dtype=jnp.bfloat16)


def to_rgb(x, p, style, skip):
    """ToRGB: 1x1 modulated conv (demodulate=False) + bias + (upsampled) skip add.

    RGB is carried channel-padded to RGBP(=8) in bf16 (lane-friendlier, half HBM);
    padded channels have zero weight/bias so they stay exactly zero.
    """
    style_t = style[:, :, None]
    if skip is not None:
        su = _upsample2_zeros(skip)
        sp = jnp.pad(su, ((0, 0), (2, 1), (2, 1), (0, 0)))
        skip = blur4(sp, gain=4.0, activate=False, out_dtype=jnp.bfloat16)
    # bias + skip add fused into the conv epilogue (no standalone elementwise pass)
    return mod_conv2d(x, p['w'], style_t, ksize=1, bias=p['bias'],
                      residual=skip, activate=False, out_dtype=jnp.bfloat16)


# --------------------------------------------------------------------------
# Parameter construction (deterministic stand-in for the .pt checkpoint)
# --------------------------------------------------------------------------

def make_channels(channel_multiplier, channel_base=512):
    full = {4: 512, 8: 512, 16: 512, 32: 512,
            64: 256 * channel_multiplier, 128: 128 * channel_multiplier,
            256: 64 * channel_multiplier, 512: 32 * channel_multiplier,
            1024: 16 * channel_multiplier}
    s = channel_base / 512.0
    return {k: max(8, int(round(v * s))) for k, v in full.items()}


def _prep_equal_linear(key, in_dim, out_dim, lr_mul=1.0, bias_init=0.0):
    # EqualLinear with the per-use scale (1/sqrt(in)*lr_mul), transpose and
    # bias*lr_mul folded ONCE here (never recomputed per forward).
    wkey, bkey = jax.random.split(key)
    weight = jax.random.normal(wkey, (out_dim, in_dim), jnp.float32) / lr_mul
    scale = (1.0 / math.sqrt(in_dim)) * lr_mul
    w = (jnp.transpose(weight) * scale).astype(jnp.bfloat16)          # (in, out)
    bias = (bias_init + 0.05 * jax.random.normal(bkey, (out_dim,), jnp.float32)) * lr_mul
    return {'w': w, 'b': bias}


def _prep_mod_conv(key, in_ch, out_ch, ksize, style_dim, upsample):
    k1, k2 = jax.random.split(key)
    weight = jax.random.normal(k1, (out_ch, in_ch, ksize, ksize), jnp.float32)
    scale = 1.0 / math.sqrt(in_ch * ksize * ksize)
    w = weight * scale
    if upsample:
        # conv_transpose2d(stride=2) == zero-insert + conv with spatially flipped
        # kernel; fold the flip into the stored weight at init.
        w = jnp.flip(w, axis=(2, 3))
    w_mat = jnp.transpose(w, (2, 3, 1, 0)).reshape(ksize * ksize, in_ch, out_ch)
    # sum_{kh,kw}(scale*w)^2 -> demod[b,oc] = rsqrt(style^2 @ wsq + 1e-8)
    wsq = jnp.transpose(jnp.sum((weight * scale) ** 2, axis=(2, 3)))    # (IC, OC)
    mod = _prep_equal_linear(k2, style_dim, in_ch, lr_mul=1.0, bias_init=1.0)
    return {'w': w_mat.astype(jnp.bfloat16), 'wsq': wsq, 'mod': mod}


def _prep_styled_conv(key, in_ch, out_ch, style_dim, upsample):
    k1, k2, k3 = jax.random.split(key, 3)
    p = _prep_mod_conv(k1, in_ch, out_ch, 3, style_dim, upsample)
    p['act_bias'] = 0.1 * jax.random.normal(k2, (out_ch,), jnp.float32)  # FusedLeakyReLU bias
    p['noise_w'] = 0.1 * jax.random.normal(k3, (), jnp.float32)          # NoiseInjection weight
    return p


def _prep_to_rgb(key, in_ch, style_dim):
    k1, k2 = jax.random.split(key)
    p = _prep_mod_conv(k1, in_ch, 3, 1, style_dim, upsample=False)       # demodulate=False
    # RGB channels padded to RGBP with zero weight/bias (padded channels stay 0)
    p['w'] = jnp.pad(p['w'], ((0, 0), (0, 0), (0, RGBP - 3)))
    p['bias'] = jnp.pad(0.1 * jax.random.normal(k2, (3,), jnp.float32), (0, RGBP - 3))
    del p['wsq']
    return p


def init_generator_params(key, img_size, latent_dim, map_layers,
                          channel_multiplier=2, channel_base=512):
    # TODO(synk): the real module loads a .pt checkpoint (torch.load / load_state_dict);
    # here parameters are deterministically random-initialized stand-ins.
    channels = make_channels(channel_multiplier, channel_base)
    log_size = int(round(math.log2(img_size)))
    keys = iter(jax.random.split(key, 64))

    mapping = [_prep_equal_linear(next(keys), latent_dim, latent_dim, lr_mul=0.01)
               for _ in range(map_layers)]
    const = jax.random.normal(next(keys), (1, 4, 4, channels[4]), jnp.float32)
    conv1 = _prep_styled_conv(next(keys), channels[4], channels[4], latent_dim, False)
    to_rgb1 = _prep_to_rgb(next(keys), channels[4], latent_dim)

    blocks = []
    in_ch = channels[4]
    for i in range(3, log_size + 1):
        out_ch = channels[2 ** i]
        blocks.append({
            'conv_up': _prep_styled_conv(next(keys), in_ch, out_ch, latent_dim, True),
            'conv':    _prep_styled_conv(next(keys), out_ch, out_ch, latent_dim, False),
            'to_rgb':  _prep_to_rgb(next(keys), out_ch, latent_dim),
        })
        in_ch = out_ch

    # Batch all per-layer style EqualLinears into ONE (latent, total_IC) matrix:
    # with a single input style (no mixing) every latent[:, i] equals w, so one wide
    # matmul per forward replaces ~2N+2 tiny launch-bound matmuls.
    mods = [conv1.pop('mod'), to_rgb1.pop('mod')]
    for blk in blocks:
        mods += [blk['conv_up'].pop('mod'), blk['conv'].pop('mod'),
                 blk['to_rgb'].pop('mod')]
    style_w = jnp.concatenate([m['w'] for m in mods], axis=1)           # (latent, tot)
    style_b = jnp.concatenate([m['b'] for m in mods], axis=0)           # (tot,)

    return {'mapping': mapping, 'const': const.astype(jnp.bfloat16),
            'conv1': conv1, 'to_rgb1': to_rgb1, 'blocks': blocks,
            'style_w': style_w, 'style_b': style_b}


def _style_slices(params):
    """(offset, width) of each layer's modulation vector in the batched style matmul."""
    dims = [params['conv1']['w'].shape[1], params['to_rgb1']['w'].shape[1]]
    for blk in params['blocks']:
        dims += [blk['conv_up']['w'].shape[1], blk['conv']['w'].shape[1],
                 blk['to_rgb']['w'].shape[1]]
    out, off = [], 0
    for d in dims:
        out.append((off, int(d)))
        off += int(d)
    return out


def compute_mean_latent(params, key, n_sample=4096):
    """generator.mean_latent(n): mean of the mapping network over random z."""
    latent_dim = params['mapping'][0]['w'].shape[0]
    z = jax.random.normal(key, (n_sample, latent_dim), jnp.float32)
    w = mapping_network(z, params['mapping'])
    return jnp.mean(w, axis=0, keepdims=True)


# --------------------------------------------------------------------------
# Forward pass (== SG2Generator.forward -> Generator.forward, single style,
#               input_is_latent=False, randomize_noise via explicit PRNG)
# --------------------------------------------------------------------------

def sg2_generator_forward(params, z, noise_key, truncation=1.0,
                          truncation_latent=None, return_latents=False,
                          noise_mode=None):
    if noise_mode is None:
        noise_mode = "prng" if _HAS_PRNG else "hbm"
    B, latent_dim = z.shape
    n_blocks = len(params['blocks'])
    n_latent = 2 * n_blocks + 2
    num_layers = 2 * n_blocks + 1

    # mapping network (z -> w), truncation trick
    w = mapping_network(z, params['mapping'])
    if truncation < 1.0 and truncation_latent is not None:
        w = truncation_latent + truncation * (w - truncation_latent)
    latent = jnp.broadcast_to(w[:, None, :], (B, n_latent, latent_dim))

    # every per-layer modulation EqualLinear in one batched matmul
    styles_all = matmul_bias_act(w, params['style_w'], params['style_b'],
                                 activate=False, out_dtype=jnp.float32)
    styles = [styles_all[:, o:o + d] for (o, d) in _style_slices(params)]

    # TODO(synk): randomize_noise in torch draws fresh randn per call; here noise is
    # driven by an explicit seed/key (deterministic given the key).
    if noise_mode == "prng":
        seeds = jax.random.randint(noise_key, (num_layers,), 0, 2 ** 31 - 1,
                                   dtype=jnp.int32)
        nrefs = [seeds[i:i + 1] for i in range(num_layers)]
    else:
        nrefs = list(jax.random.split(noise_key, num_layers))

    # ConstantInput
    ch4 = params['const'].shape[-1]
    x = jnp.broadcast_to(params['const'], (B, 4, 4, ch4))

    x = styled_conv(x, params['conv1'], styles[0], nrefs[0],
                    upsample=False, noise_mode=noise_mode)
    skip = to_rgb(x, params['to_rgb1'], styles[1], None)

    si, li = 2, 1
    for blk in params['blocks']:
        x = styled_conv(x, blk['conv_up'], styles[si], nrefs[li],
                        upsample=True, noise_mode=noise_mode)
        si += 1; li += 1
        x = styled_conv(x, blk['conv'], styles[si], nrefs[li],
                        upsample=False, noise_mode=noise_mode)
        si += 1; li += 1
        skip = to_rgb(x, blk['to_rgb'], styles[si], skip)
        si += 1

    # slice the padded RGB channels off, NCHW like torch
    image = jnp.transpose(skip[..., :3].astype(jnp.float32), (0, 3, 1, 2))
    return (image, latent) if return_latents else (image, None)


# --------------------------------------------------------------------------

if __name__ == "__main__":
    key = jax.random.PRNGKey(0)
    pkey, zkey, nkey, mkey = jax.random.split(key, 4)

    # Small but structurally faithful config: img_size=16 -> two upsample blocks
    # (4 -> 8 -> 16), narrow channels, small latent.
    img_size = 16
    latent_dim = 32
    map_layers = 4          # reference default is 8; same structure, smaller
    params = init_generator_params(pkey, img_size=img_size, latent_dim=latent_dim,
                                   map_layers=map_layers, channel_multiplier=2,
                                   channel_base=32)

    # SG2Generator.__init__ also computes mean_latent (only used when truncation < 1).
    mean_latent = compute_mean_latent(params, mkey, n_sample=1024)

    z = jax.random.normal(zkey, (2, latent_dim), jnp.float32)

    def run(mode):
        fwd = jax.jit(functools.partial(sg2_generator_forward, truncation=1.0,
                                        noise_mode=mode))
        img, _ = fwd(params, z, nkey, truncation_latent=mean_latent)
        return jax.block_until_ready(img)

    try:
        image = run("prng" if _HAS_PRNG else "hbm")
    except Exception:
        # TODO(synk): in-kernel PRNG noise unsupported on this jax build; fall back
        # to HBM-resident noise (same math, noise generated with jax.random outside).
        image = run("hbm")

    assert image.shape == (2, 3, img_size, img_size) and image.dtype == jnp.float32
    assert bool(jnp.all(jnp.isfinite(image)))
    print("KERNEL_OK")
</pallas_src>

<mosaic_0001>
module attributes {stable_mosaic.version = 11 : i64} {
  func.func @_matmul_kernel_single_k(%arg0: i32, %arg1: i32, %arg2: memref<256x128xbf16, #tpu.memory_space<vmem>>, %arg3: memref<128x128xbf16, #tpu.memory_space<vmem>>, %arg4: memref<1x128xf32, #tpu.memory_space<vmem>>, %arg5: memref<256x128xf32, #tpu.memory_space<vmem>>) attributes {dimension_semantics = [#tpu.dimension_semantics<parallel>, #tpu.dimension_semantics<parallel>], iteration_bounds = array<i64: 4, 1>, scalar_prefetch = 0 : i64, scratch_operands = 0 : i64, tpu.core_type = #tpu.core_type<tc>, window_params = [{transform_indices = @transform_0, window_bounds = array<i64: 256, 128>}, {transform_indices = @transform_1, window_bounds = array<i64: 128, 128>}, {transform_indices = @transform_2, window_bounds = array<i64: 1, 128>}, {transform_indices = @transform_3, window_bounds = array<i64: 256, 128>}]} {
    %c0 = arith.constant 0 : index
    %c0_0 = arith.constant 0 : index
    %0 = vector.load %arg2[%c0, %c0_0] : memref<256x128xbf16, #tpu.memory_space<vmem>>, vector<256x128xbf16>
    %c0_1 = arith.constant 0 : index
    %c0_2 = arith.constant 0 : index
    %1 = vector.load %arg3[%c0_1, %c0_2] : memref<128x128xbf16, #tpu.memory_space<vmem>>, vector<128x128xbf16>
    %cst = arith.constant dense<0.000000e+00> : vector<256x128xf32>
    %2 = tpu.matmul %0, %1, %cst {dimension_numbers = #tpu.dot_dimension_numbers<[1], [0], [0], [1], [0, 0, 1, 1], [], []>} : vector<256x128xbf16>, vector<128x128xbf16>, vector<256x128xf32> -> vector<256x128xf32>
    %c0_3 = arith.constant 0 : index
    %c0_4 = arith.constant 0 : index
    %3 = vector.load %arg4[%c0_3, %c0_4] : memref<1x128xf32, #tpu.memory_space<vmem>>, vector<1x128xf32>
    %4 = vector.broadcast %3 : vector<1x128xf32> to vector<256x128xf32>
    %5 = arith.addf %2, %4 : vector<256x128xf32>
    %cst_5 = arith.constant 0.000000e+00 : f32
    %6 = vector.broadcast %cst_5 : f32 to vector<256x128xf32>
    %7 = arith.cmpf oge, %5, %6 : vector<256x128xf32>
    %cst_6 = arith.constant 2.000000e-01 : f32
    %8 = vector.broadcast %cst_6 : f32 to vector<256x128xf32>
    %9 = arith.mulf %8, %5 : vector<256x128xf32>
    %10 = arith.select %7, %5, %9 : vector<256x128xi1>, vector<256x128xf32>
    %cst_7 = arith.constant 1.41421354 : f32
    %11 = vector.broadcast %cst_7 : f32 to vector<256x128xf32>
    %12 = arith.mulf %10, %11 : vector<256x128xf32>
    %c0_8 = arith.constant 0 : index
    %c0_9 = arith.constant 0 : index
    %13 = vector.load %arg5[%c0_8, %c0_9] : memref<256x128xf32, #tpu.memory_space<vmem>>, vector<256x128xf32>
    tpu.vector_store %arg5[%c0_8, %c0_9], %12 {strides = array<i32>} : memref<256x128xf32, #tpu.memory_space<vmem>>, vector<256x128xf32>,
    return
  }
  func.func @transform_0(%arg0: i32, %arg1: i32) -> (i32, i32) {
    %c0_i32 = arith.constant 0 : i32
    %c0_i32_0 = arith.constant 0 : i32
    return %arg0, %c0_i32 : i32, i32
  }
  func.func @transform_1(%arg0: i32, %arg1: i32) -> (i32, i32) {
    %c0_i32 = arith.constant 0 : i32
    %c0_i32_0 = arith.constant 0 : i32
    return %c0_i32, %arg1 : i32, i32
  }
  func.func @transform_2(%arg0: i32, %arg1: i32) -> (i32, i32) {
    %c0_i32 = arith.constant 0 : i32
    %c0_i32_0 = arith.constant 0 : i32
    return %c0_i32, %arg1 : i32, i32
  }
  func.func @transform_3(%arg0: i32, %arg1: i32) -> (i32, i32) {
    %c0_i32 = arith.constant 0 : i32
    return %arg0, %arg1 : i32, i32
  }
}

</mosaic_0001>

<llo_original>
// kernel: tpu_custom_call.1
$region0: #{tpu_custom_call.1}
  #allocation0 [shape = 'u32[]', space=smem, size = 0x4, offset = 0x4, fixed_abs, tag = 'smem constant byte address 0x4 - core index']
  #allocation1 [shape = 'u32[72,128]{1,0:T(1,128)}', space=vmem, size = 0x9000, scoped, tag = 'internal scratch']
  %s0 = inlined_call_operand.hbm [shape: bf16[1024,128], index: 0, kind: input, shape index: {}]
  %s1 = inlined_call_operand.hbm [shape: bf16[128,128], index: 1, kind: input, shape index: {}]
  %s2 = inlined_call_operand.vmem [shape: f32[1,128], index: 2, kind: input, shape index: {}]
  %s3 = inlined_call_operand.hbm [shape: f32[1024,128], index: 3, kind: output, shape index: {}]
  %s4 = sld [smem:[#allocation0]]
  $region53: #{tpu_custom_call.1} parent=0
    _
  %s6 = ssub.s32 1, %s4
  %s7 = scalar_select 0, %s6, %s4
  $region1: #{tpu_custom_call.1} parent=0
    #allocation2 [shape = 'u8[131072]{0}', space=vmem, size = 0x20000, scoped, tag = 'input window, operand 0']
    #allocation3 [shape = 's32[2]{0}', space=sflag, size = 0x8, scoped, tag = 'scoped memory for tpu_custom_call.1']
    #allocation4 [shape = 's32[2]{0}', space=sflag, size = 0x8, scoped, tag = 'scoped memory for tpu_custom_call.1']
    #allocation5 [shape = 'u8[32768]{0}', space=vmem, size = 0x8000, scoped, tag = 'input window, operand 1, single buffered']
    #allocation6 [shape = 's32[1]{0}', space=sflag, size = 0x4, scoped, tag = 'scoped memory for tpu_custom_call.1']
    #allocation7 [shape = 'u8[262144]{0}', space=vmem, size = 0x40000, scoped, tag = 'output window, operand 0']
    %8 = vsyncpa [#allocation3], 0
    %s9 = scalar_lea.sflag [#allocation3], 1
    %10 = vsyncpa %s9, 0
    %11 = vsyncpa [#allocation6], 0
    %12 = vsyncpa [#allocation4], 0
    %s13 = scalar_lea.sflag [#allocation4], 1
    %14 = vsyncpa %s13, 0
    loop: start=0, step=1, limit=6
    $region2: #{tpu_custom_call.1} parent=1 // loop_pre_header
      _
    $region3: #{tpu_custom_call.1} parent=1 // loop_header
      %s16 = sphi 0, %s20
      %p17 = scmp.ge.s32.totalorder %s16, 6
      %s23 = sphi 0, %s35
      %s24 = sphi 0, %s31
      %s25 = sphi 0, %s23
      %s26 = sphi 0, %s24
      %s27 = sphi 0, %s25
      %s28 = sphi 0, %s26
      %s38 = sphi 0, %s40
      %s41 = sphi 0, %s38
      %s42 = sphi 0, %s41
      %s58 = sphi 0, %s42
      %s64 = sphi 0, %s66
      %s67 = sphi 0, %s64
      %s68 = sphi 0, %s67
      %s84 = sphi 0, %s68
      %s90 = sphi 0, %s92
      %s93 = sphi 0, %s90
      %s94 = sphi 0, %s93
      %s110 = sphi 0, %s94
      %s118 = sphi 0, %s120
      %s121 = sphi 0, %s118
      %s122 = sphi 0, %s121
      %s138 = sphi 0, %s122
    $region4: #{tpu_custom_call.1} parent=1 // loop_header_branch
      %19 = sbr.rel (%p17) target = $region8
    $region5: #{tpu_custom_call.1} parent=1 // loop_body
      %s21 = ssub.s32 %s16, 1
      %s22 = ssub.s32 %s16, 2
      %s29 = sadd.s32 1, %s24
      %p30 = scmp.ge.s32.totalorder %s29, 1
      %s31 = scalar_select %p30, 0, %s29
      %s32 = sadd.s32 1, %s23
      %s33 = scalar_select %p30, %s32, %s23
      %p34 = scmp.ge.s32.totalorder %s33, 4
      %s35 = scalar_select %p34, 0, %s33
      %s36 = ssub.s32 %s23, %s35
      %p37 = scmp.eq.s32.totalorder %s36, 0
      %s39 = sadd.s32 %s38, 1
      %s40 = scalar_select %p37, %s38, %s39
      %p43 = pneg %p37
      %p44 = scmp.eq.s32.totalorder %s16, 3
      %p45 = por %p43, %p44
      %p46 = scmp.ne.s32.totalorder %s38, %s41
      %p47 = scmp.eq.s32.totalorder %s16, 0
      %p48 = por %p46, %p47
      %p49 = scmp.ne.s32.totalorder %s38, %s41
      %p50 = scmp.eq.s32.totalorder %s21, 3
      %p51 = por %p49, %p50
      %p52 = scmp.ne.s32.totalorder %s41, %s42
      %p53 = scmp.eq.s32.totalorder %s21, 0
      %p54 = por %p52, %p53
      %p55 = scmp.ne.s32.totalorder %s41, %s42
      %p56 = scmp.eq.s32.totalorder %s22, 3
      %p57 = por %p55, %p56
      %p59 = scmp.ne.s32.totalorder %s42, %s58
      %p60 = scmp.eq.s32.totalorder %s22, 0
      %p61 = por %p59, %p60
      %s62 = ssub.s32 %s24, %s31
      %p63 = scmp.eq.s32.totalorder %s62, 0
      %s65 = sadd.s32 %s64, 1
      %s66 = scalar_select %p63, %s64, %s65
      %p69 = pneg %p63
      %p70 = scmp.eq.s32.totalorder %s16, 3
      %p71 = por %p69, %p70
      %p72 = scmp.ne.s32.totalorder %s64, %s67
      %p73 = scmp.eq.s32.totalorder %s16, 0
      %p74 = por %p72, %p73
      %p75 = scmp.ne.s32.totalorder %s64, %s67
      %p76 = scmp.eq.s32.totalorder %s21, 3
      %p77 = por %p75, %p76
      %p78 = scmp.ne.s32.totalorder %s67, %s68
      %p79 = scmp.eq.s32.totalorder %s21, 0
      %p80 = por %p78, %p79
      %p81 = scmp.ne.s32.totalorder %s67, %s68
      %p82 = scmp.eq.s32.totalorder %s22, 3
      %p83 = por %p81, %p82
      %p85 = scmp.ne.s32.totalorder %s68, %s84
      %p86 = scmp.eq.s32.totalorder %s22, 0
      %p87 = por %p85, %p86
      %s88 = ssub.s32 %s24, %s31
      %p89 = scmp.eq.s32.totalorder %s88, 0
      %s91 = sadd.s32 %s90, 1
      %s92 = scalar_select %p89, %s90, %s91
      %p95 = pneg %p89
      %p96 = scmp.eq.s32.totalorder %s16, 3
      %p97 = por %p95, %p96
      %p98 = scmp.ne.s32.totalorder %s90, %s93
      %p99 = scmp.eq.s32.totalorder %s16, 0
      %p100 = por %p98, %p99
      %p101 = scmp.ne.s32.totalorder %s90, %s93
      %p102 = scmp.eq.s32.totalorder %s21, 3
      %p103 = por %p101, %p102
      %p104 = scmp.ne.s32.totalorder %s93, %s94
      %p105 = scmp.eq.s32.totalorder %s21, 0
      %p106 = por %p104, %p105
      %p107 = scmp.ne.s32.totalorder %s93, %s94
      %p108 = scmp.eq.s32.totalorder %s22, 3
      %p109 = por %p107, %p108
      %p111 = scmp.ne.s32.totalorder %s94, %s110
      %p112 = scmp.eq.s32.totalorder %s22, 0
      %p113 = por %p111, %p112
      %s114 = ssub.s32 %s23, %s35
      %s115 = ssub.s32 %s24, %s31
      %s116 = sor.u32 %s114, %s115
      %p117 = scmp.eq.s32.totalorder %s116, 0
      %s119 = sadd.s32 %s118, 1
      %s120 = scalar_select %p117, %s118, %s119
      %p123 = pneg %p117
      %p124 = scmp.eq.s32.totalorder %s16, 3
      %p125 = por %p123, %p124
      %p126 = scmp.ne.s32.totalorder %s118, %s121
      %p127 = scmp.eq.s32.totalorder %s16, 0
      %p128 = por %p126, %p127
      %p129 = scmp.ne.s32.totalorder %s118, %s121
      %p130 = scmp.eq.s32.totalorder %s21, 3
      %p131 = por %p129, %p130
      %p132 = scmp.ne.s32.totalorder %s121, %s122
      %p133 = scmp.eq.s32.totalorder %s21, 0
      %p134 = por %p132, %p133
      %p135 = scmp.ne.s32.totalorder %s121, %s122
      %p136 = scmp.eq.s32.totalorder %s22, 3
      %p137 = por %p135, %p136
      %p139 = scmp.ne.s32.totalorder %s122, %s138
      %p140 = scmp.eq.s32.totalorder %s22, 0
      %p141 = por %p139, %p140
      %p142 = scmp.le.s32.totalorder 1, %s16
      %p143 = scmp.lt.s32.totalorder %s16, 5
      %p144 = pnand %p142, %p143
      %p145 = pneg %p144
      // Predicated region
      $region9: #{tpu_custom_call.1} parent=5 // pred_check
        _
      $region10: #{tpu_custom_call.1} parent=5 // pred_check_branch
        %147 = sbr.rel (%p144) target = $region12
      $region11: #{tpu_custom_call.1} parent=5 // pred_region
        %s148 = ssub.s32 %s16, 1
        // Predicated region
        $region13: #{tpu_custom_call.1} parent=11 // pred_check
          %p149 = pneg %p80
        $region14: #{tpu_custom_call.1} parent=11 // pred_check_branch
          %151 = sbr.rel (%p149) target = $region16
        $region15: #{tpu_custom_call.1} parent=11 // pred_region
          %153 = vsyncadd [#allocation6], 0
          %s154 = smul.addr %s26, 4
          %s155 = scalar_lea.hbm %s1, %s154
          %s156 = sshll.u32 %s155, 4
          %s157 = int_to_ptr.hbm [resolvable:$true] %s156
          %s158 = sshll.u32 [#allocation5], 4
          %s159 = int_to_ptr.vmem [resolvable:$true] %s158
          %164 = dma.hbm_to_vmem [thread:$0]  %s157, 1024, %s159, [#allocation6], 64, 64, 4
        $region16: #{tpu_custom_call.1} parent=11 // pred_fallthru
          _
        // Predicated region
        $region17: #{tpu_custom_call.1} parent=11 // pred_check
          %p165 = pneg %p106
        $region18: #{tpu_custom_call.1} parent=11 // pred_check_branch
          %167 = sbr.rel (%p165) target = $region20
        $region19: #{tpu_custom_call.1} parent=11 // pred_region
          %p168 = scmp.lt.s32.totalorder %s26, 0
          %s169 = scalar_select %p168, %s26, 0
          %s170 = scalar_lea.vmem %s2, %s169
        $region20: #{tpu_custom_call.1} parent=11 // pred_fallthru
          _
      $region12: #{tpu_custom_call.1} parent=5 // pred_fallthru
        _
      %p171 = scmp.lt.s32.totalorder %s16, 4
      // Predicated region
      $region21: #{tpu_custom_call.1} parent=5 // pred_check
        %p172 = pneg %p171
      $region22: #{tpu_custom_call.1} parent=5 // pred_check_branch
        %174 = sbr.rel (%p172) target = $region24
      $region23: #{tpu_custom_call.1} parent=5 // pred_region
        // Predicated region
        $region25: #{tpu_custom_call.1} parent=23 // pred_check
          %p175 = pneg %p48
        $region26: #{tpu_custom_call.1} parent=23 // pred_check_branch
          %177 = sbr.rel (%p175) target = $region28
        $region27: #{tpu_custom_call.1} parent=23 // pred_region
          %s178 = sand.u32 %s38, 1
          %s179 = scalar_lea.sflag [#allocation3], %s178
          %s180 = sand.u32 %s38, 1
          %s181 = smul.addr %s180, 128
          %s182 = scalar_lea.vmem [#allocation2], %s181
          %s183 = smul.u32 32, %s23
          %185 = vsyncadd %s179, 0
          %s186 = smul.addr %s183, 4
          %s187 = scalar_lea.hbm %s0, %s186
          %s188 = sshll.u32 %s187, 4
          %s189 = int_to_ptr.hbm [resolvable:$true] %s188
          %s190 = sshll.u32 %s182, 4
          %s191 = int_to_ptr.vmem [resolvable:$true] %s190
          %196 = dma.hbm_to_vmem [thread:$0]  %s189, 2048, %s191, %s179, 64, 64, 4
        $region28: #{tpu_custom_call.1} parent=23 // pred_fallthru
          _
      $region24: #{tpu_custom_call.1} parent=5 // pred_fallthru
        _
      %p197 = scmp.le.s32.totalorder 1, %s16
      %p198 = scmp.lt.s32.totalorder %s16, 5
      %p199 = pnand %p197, %p198
      %p200 = pneg %p199
      // Predicated region
      $region29: #{tpu_custom_call.1} parent=5 // pred_check
        _
      $region30: #{tpu_custom_call.1} parent=5 // pred_check_branch
        %202 = sbr.rel (%p199) target = $region32
      $region31: #{tpu_custom_call.1} parent=5 // pred_region
        %s203 = ssub.s32 %s16, 1
        %s204 = sand.u32 %s41, 1
        %s205 = scalar_lea.sflag [#allocation3], %s204
        %s206 = sand.u32 %s41, 1
        %s207 = smul.addr %s206, 128
        %s208 = scalar_lea.vmem [#allocation2], %s207
        // Predicated region
        $region33: #{tpu_custom_call.1} parent=31 // pred_check
          %p209 = pneg %p54
        $region34: #{tpu_custom_call.1} parent=31 // pred_check_branch
          %211 = sbr.rel (%p209) target = $region36
        $region35: #{tpu_custom_call.1} parent=31 // pred_region
          %213 = dma.done %s205, 2048
        $region36: #{tpu_custom_call.1} parent=31 // pred_fallthru
          _
        // Predicated region
        $region37: #{tpu_custom_call.1} parent=31 // pred_check
          %p214 = pneg %p80
        $region38: #{tpu_custom_call.1} parent=31 // pred_check_branch
          %216 = sbr.rel (%p214) target = $region40
        $region39: #{tpu_custom_call.1} parent=31 // pred_region
          %218 = dma.done [#allocation6], 1024
        $region40: #{tpu_custom_call.1} parent=31 // pred_fallthru
          _
        %s219 = sand.u32 %s41, 1
        %s220 = scalar_lea.sflag [#allocation3], %s219
        %s221 = sand.u32 %s41, 1
        %s222 = smul.addr %s221, 128
        %s223 = scalar_lea.vmem [#allocation2], %s222
        %p224 = pneg %p54
        %p225 = pneg %p51
        %p226 = pneg %p80
        %p227 = pneg %p77
        %p228 = scmp.lt.s32.totalorder %s26, 0
        %s229 = scalar_select %p228, %s26, 0
        %s230 = scalar_lea.vmem %s2, %s229
        %p231 = pneg %p106
        %p232 = pneg %p103
        %p233 = pneg %p134
        %p234 = pneg %p131
        %s235 = sand.u32 %s121, 1
        %s236 = scalar_lea.sflag [#allocation4], %s235
        %s237 = sand.u32 %s121, 1
        %s238 = smul.addr %s237, 256
        %s239 = scalar_lea.vmem [#allocation7], %s238
        %s240 = smul.u32 32, %s25
        %p241 = scmp.lt.s32.totalorder %s26, 0
        %s242 = scalar_select %p241, %s26, 0
        %s243 = scalar_lea.vmem %s2, %s242
        %s244 = smul.u32 32, %s25
        %v245 = vld [vmem:[%s208] sm:$0xf]
        %v246 = vld [vmem:[%s208 + $0x4] sm:$0xf]
        %v247 = vld [vmem:[%s208 + $0x8] sm:$0xf]
        %v248 = vld [vmem:[%s208 + $0xc] sm:$0xf]
        %v249 = vld [vmem:[%s208 + $0x10] sm:$0xf]
        %v250 = vld [vmem:[%s208 + $0x14] sm:$0xf]
        %v251 = vld [vmem:[%s208 + $0x18] sm:$0xf]
        %v252 = vld [vmem:[%s208 + $0x1c] sm:$0xf]
        %v253 = vld [vmem:[%s208 + $0x20] sm:$0xf]
        %v254 = vld [vmem:[%s208 + $0x24] sm:$0xf]
        %v255 = vld [vmem:[%s208 + $0x28] sm:$0xf]
        %v256 = vld [vmem:[%s208 + $0x2c] sm:$0xf]
        %v257 = vld [vmem:[%s208 + $0x30] sm:$0xf]
        %v258 = vld [vmem:[%s208 + $0x34] sm:$0xf]
        %v259 = vld [vmem:[%s208 + $0x38] sm:$0xf]
        %v260 = vld [vmem:[%s208 + $0x3c] sm:$0xf]
        %v261 = vld [vmem:[%s208 + $0x40] sm:$0xf]
        %v262 = vld [vmem:[%s208 + $0x44] sm:$0xf]
        %v263 = vld [vmem:[%s208 + $0x48] sm:$0xf]
        %v264 = vld [vmem:[%s208 + $0x4c] sm:$0xf]
        %v265 = vld [vmem:[%s208 + $0x50] sm:$0xf]
        %v266 = vld [vmem:[%s208 + $0x54] sm:$0xf]
        %v267 = vld [vmem:[%s208 + $0x58] sm:$0xf]
        %v268 = vld [vmem:[%s208 + $0x5c] sm:$0xf]
        %v269 = vld [vmem:[%s208 + $0x60] sm:$0xf]
        %v270 = vld [vmem:[%s208 + $0x64] sm:$0xf]
        %v271 = vld [vmem:[%s208 + $0x68] sm:$0xf]
        %v272 = vld [vmem:[%s208 + $0x6c] sm:$0xf]
        %v273 = vld [vmem:[%s208 + $0x70] sm:$0xf]
        %v274 = vld [vmem:[%s208 + $0x74] sm:$0xf]
        %v275 = vld [vmem:[%s208 + $0x78] sm:$0xf]
        %v276 = vld [vmem:[%s208 + $0x7c] sm:$0xf]
        %v277 = vld [vmem:[#allocation5] sm:$0xf]
        %v278 = vld [vmem:[#allocation5 + $0x4] sm:$0xf]
        %v279 = vld [vmem:[#allocation5 + $0x8] sm:$0xf]
        %v280 = vld [vmem:[#allocation5 + $0xc] sm:$0xf]
        %v281 = vld [vmem:[#allocation5 + $0x10] sm:$0xf]
        %v282 = vld [vmem:[#allocation5 + $0x14] sm:$0xf]
        %v283 = vld [vmem:[#allocation5 + $0x18] sm:$0xf]
        %v284 = vld [vmem:[#allocation5 + $0x1c] sm:$0xf]
        %v285 = vld [vmem:[#allocation5 + $0x20] sm:$0xf]
        %v286 = vld [vmem:[#allocation5 + $0x24] sm:$0xf]
        %v287 = vld [vmem:[#allocation5 + $0x28] sm:$0xf]
        %v288 = vld [vmem:[#allocation5 + $0x2c] sm:$0xf]
        %v289 = vld [vmem:[#allocation5 + $0x30] sm:$0xf]
        %v290 = vld [vmem:[#allocation5 + $0x34] sm:$0xf]
        %v291 = vld [vmem:[#allocation5 + $0x38] sm:$0xf]
        %v292 = vld [vmem:[#allocation5 + $0x3c] sm:$0xf]
        %v293 = vld [vmem:[%s243] sm:$0x1]
        %v295 = vperm.slane %v293, 0
        %v329 = vunpack.c.l.b16 %v245
        %v330 = vunpack.c.l.b16 %v246
        %v331 = vunpack.c.l.b16 %v247
        %v332 = vunpack.c.l.b16 %v248
        %v333 = vunpack.c.l.b16 %v249
        %v334 = vunpack.c.l.b16 %v250
        %v335 = vunpack.c.l.b16 %v251
        %v336 = vunpack.c.l.b16 %v252
        %v337 = vunpack.c.l.b16 %v253
        %v338 = vunpack.c.l.b16 %v254
        %v339 = vunpack.c.l.b16 %v255
        %v340 = vunpack.c.l.b16 %v256
        %v341 = vunpack.c.l.b16 %v257
        %v342 = vunpack.c.l.b16 %v258
        %v343 = vunpack.c.l.b16 %v259
        %v344 = vunpack.c.l.b16 %v260
        %v345 = vunpack.c.l.b16 %v261
        %v346 = vunpack.c.l.b16 %v262
        %v347 = vunpack.c.l.b16 %v263
        %v348 = vunpack.c.l.b16 %v264
        %v349 = vunpack.c.l.b16 %v265
        %v350 = vunpack.c.l.b16 %v266
        %v351 = vunpack.c.l.b16 %v267
        %v352 = vunpack.c.l.b16 %v268
        %v353 = vunpack.c.l.b16 %v269
        %v354 = vunpack.c.l.b16 %v270
        %v355 = vunpack.c.l.b16 %v271
        %v356 = vunpack.c.l.b16 %v272
        %v357 = vunpack.c.l.b16 %v273
        %v358 = vunpack.c.l.b16 %v274
        %v359 = vunpack.c.l.b16 %v275
        %v360 = vunpack.c.l.b16 %v276
        %v361 = vpack.c.b16 %v330, %v329
        %v362 = vpack.c.b16 %v332, %v331
        %v363 = vpack.c.b16 %v334, %v333
        %v364 = vpack.c.b16 %v336, %v335
        %v365 = vpack.c.b16 %v338, %v337
        %v366 = vpack.c.b16 %v340, %v339
        %v367 = vpack.c.b16 %v342, %v341
        %v368 = vpack.c.b16 %v344, %v343
        %v369 = vpack.c.b16 %v346, %v345
        %v370 = vpack.c.b16 %v348, %v347
        %v371 = vpack.c.b16 %v350, %v349
        %v372 = vpack.c.b16 %v352, %v351
        %v373 = vpack.c.b16 %v354, %v353
        %v374 = vpack.c.b16 %v356, %v355
        %v375 = vpack.c.b16 %v358, %v357
        %v376 = vpack.c.b16 %v360, %v359
        %v409 = vunpack.c.l.b16 %v277
        %v410 = vunpack.c.l.b16 %v278
        %v411 = vunpack.c.l.b16 %v279
        %v412 = vunpack.c.l.b16 %v280
        %v413 = vunpack.c.l.b16 %v281
        %v414 = vunpack.c.l.b16 %v282
        %v415 = vunpack.c.l.b16 %v283
        %v416 = vunpack.c.l.b16 %v284
        %v417 = vunpack.c.l.b16 %v285
        %v418 = vunpack.c.l.b16 %v286
        %v419 = vunpack.c.l.b16 %v287
        %v420 = vunpack.c.l.b16 %v288
        %v421 = vunpack.c.l.b16 %v289
        %v422 = vunpack.c.l.b16 %v290
        %v423 = vunpack.c.l.b16 %v291
        %v424 = vunpack.c.l.b16 %v292
        %v425 = vpack.c.b16 %v410, %v409
        %v426 = vpack.c.b16 %v412, %v411
        %v427 = vpack.c.b16 %v414, %v413
        %v428 = vpack.c.b16 %v416, %v415
        %v429 = vpack.c.b16 %v418, %v417
        %v430 = vpack.c.b16 %v420, %v419
        %v431 = vpack.c.b16 %v422, %v421
        %v432 = vpack.c.b16 %v424, %v423
        %441 = vmatpush.bf16.msra.mxu0 %v432
        %442 = vmatpush.bf16.msra.mxu0 %v431
        %443 = vmatpush.bf16.msra.mxu0 %v430
        %444 = vmatpush.bf16.msra.mxu0 %v429
        %445 = vmatpush.bf16.msra.mxu0 %v428
        %446 = vmatpush.bf16.msra.mxu0 %v427
        %447 = vmatpush.bf16.msra.mxu0 %v426
        %448 = vmatpush.bf16.msra.mxu0 %v425
        %449 = vmatmul.bf16.gmra.mxu0 %v361
        %v450 = vpop.f32.mrf.mxu0
        %v451 = vadd.f32 %v295, %v450
        %v452 = vpop.f32.mrf.mxu0
        %v453 = vadd.f32 %v295, %v452
        %454 = vmatmul.bf16.gmra.mxu0 %v362
        %v455 = vpop.f32.mrf.mxu0
        %v456 = vadd.f32 %v295, %v455
        %v457 = vpop.f32.mrf.mxu0
        %v458 = vadd.f32 %v295, %v457
        %459 = vmatmul.bf16.gmra.mxu0 %v363
        %v460 = vpop.f32.mrf.mxu0
        %v461 = vadd.f32 %v295, %v460
        %v462 = vpop.f32.mrf.mxu0
        %v463 = vadd.f32 %v295, %v462
        %464 = vmatmul.bf16.gmra.mxu0 %v364
        %v465 = vpop.f32.mrf.mxu0
        %v466 = vadd.f32 %v295, %v465
        %v467 = vpop.f32.mrf.mxu0
        %v468 = vadd.f32 %v295, %v467
        %469 = vmatmul.bf16.gmra.mxu0 %v365
        %v470 = vpop.f32.mrf.mxu0
        %v471 = vadd.f32 %v295, %v470
        %v472 = vpop.f32.mrf.mxu0
        %v473 = vadd.f32 %v295, %v472
        %474 = vmatmul.bf16.gmra.mxu0 %v366
        %v475 = vpop.f32.mrf.mxu0
        %v476 = vadd.f32 %v295, %v475
        %v477 = vpop.f32.mrf.mxu0
        %v478 = vadd.f32 %v295, %v477
        %479 = vmatmul.bf16.gmra.mxu0 %v367
        %v480 = vpop.f32.mrf.mxu0
        %v481 = vadd.f32 %v295, %v480
        %v482 = vpop.f32.mrf.mxu0
        %v483 = vadd.f32 %v295, %v482
        %484 = vmatmul.bf16.gmra.mxu0 %v368
        %v485 = vpop.f32.mrf.mxu0
        %v486 = vadd.f32 %v295, %v485
        %v487 = vpop.f32.mrf.mxu0
        %v488 = vadd.f32 %v295, %v487
        %489 = vmatmul.bf16.gmra.mxu0 %v369
        %v490 = vpop.f32.mrf.mxu0
        %v491 = vadd.f32 %v295, %v490
        %v492 = vpop.f32.mrf.mxu0
        %v493 = vadd.f32 %v295, %v492
        %494 = vmatmul.bf16.gmra.mxu0 %v370
        %v495 = vpop.f32.mrf.mxu0
        %v496 = vadd.f32 %v295, %v495
        %v497 = vpop.f32.mrf.mxu0
        %v498 = vadd.f32 %v295, %v497
        %499 = vmatmul.bf16.gmra.mxu0 %v371
        %v500 = vpop.f32.mrf.mxu0
        %v501 = vadd.f32 %v295, %v500
        %v502 = vpop.f32.mrf.mxu0
        %v503 = vadd.f32 %v295, %v502
        %504 = vmatmul.bf16.gmra.mxu0 %v372
        %v505 = vpop.f32.mrf.mxu0
        %v506 = vadd.f32 %v295, %v505
        %v507 = vpop.f32.mrf.mxu0
        %v508 = vadd.f32 %v295, %v507
        %509 = vmatmul.bf16.gmra.mxu0 %v373
        %v510 = vpop.f32.mrf.mxu0
        %v511 = vadd.f32 %v295, %v510
        %v512 = vpop.f32.mrf.mxu0
        %v513 = vadd.f32 %v295, %v512
        %514 = vmatmul.bf16.gmra.mxu0 %v374
        %v515 = vpop.f32.mrf.mxu0
        %v516 = vadd.f32 %v295, %v515
        %v517 = vpop.f32.mrf.mxu0
        %v518 = vadd.f32 %v295, %v517
        %519 = vmatmul.bf16.gmra.mxu0 %v375
        %v520 = vpop.f32.mrf.mxu0
        %v521 = vadd.f32 %v295, %v520
        %v522 = vpop.f32.mrf.mxu0
        %v523 = vadd.f32 %v295, %v522
        %524 = vmatmul.bf16.gmra.mxu0 %v376
        %v525 = vpop.f32.mrf.mxu0
        %v526 = vadd.f32 %v295, %v525
        %v527 = vpop.f32.mrf.mxu0
        %v528 = vadd.f32 %v295, %v527
        %529 = vdwg.mxu0
        %vm530 = vcmp.ge.f32.partialorder %v451, 0.0
        %vm531 = vcmp.ge.f32.partialorder %v453, 0.0
        %vm532 = vcmp.ge.f32.partialorder %v456, 0.0
        %vm533 = vcmp.ge.f32.partialorder %v458, 0.0
        %vm534 = vcmp.ge.f32.partialorder %v461, 0.0
        %vm535 = vcmp.ge.f32.partialorder %v463, 0.0
        %vm536 = vcmp.ge.f32.partialorder %v466, 0.0
        %vm537 = vcmp.ge.f32.partialorder %v468, 0.0
        %vm538 = vcmp.ge.f32.partialorder %v471, 0.0
        %vm539 = vcmp.ge.f32.partialorder %v473, 0.0
        %vm540 = vcmp.ge.f32.partialorder %v476, 0.0
        %vm541 = vcmp.ge.f32.partialorder %v478, 0.0
        %vm542 = vcmp.ge.f32.partialorder %v481, 0.0
        %vm543 = vcmp.ge.f32.partialorder %v483, 0.0
        %vm544 = vcmp.ge.f32.partialorder %v486, 0.0
        %vm545 = vcmp.ge.f32.partialorder %v488, 0.0
        %vm546 = vcmp.ge.f32.partialorder %v491, 0.0
        %vm547 = vcmp.ge.f32.partialorder %v493, 0.0
        %vm548 = vcmp.ge.f32.partialorder %v496, 0.0
        %vm549 = vcmp.ge.f32.partialorder %v498, 0.0
        %vm550 = vcmp.ge.f32.partialorder %v501, 0.0
        %vm551 = vcmp.ge.f32.partialorder %v503, 0.0
        %vm552 = vcmp.ge.f32.partialorder %v506, 0.0
        %vm553 = vcmp.ge.f32.partialorder %v508, 0.0
        %vm554 = vcmp.ge.f32.partialorder %v511, 0.0
        %vm555 = vcmp.ge.f32.partialorder %v513, 0.0
        %vm556 = vcmp.ge.f32.partialorder %v516, 0.0
        %vm557 = vcmp.ge.f32.partialorder %v518, 0.0
        %vm558 = vcmp.ge.f32.partialorder %v521, 0.0
        %vm559 = vcmp.ge.f32.partialorder %v523, 0.0
        %vm560 = vcmp.ge.f32.partialorder %v526, 0.0
        %vm561 = vcmp.ge.f32.partialorder %v528, 0.0
        %v562 = vmul.f32 %v451, 0.2
        %v563 = vmul.f32 %v453, 0.2
        %v564 = vmul.f32 %v456, 0.2
        %v565 = vmul.f32 %v458, 0.2
        %v566 = vmul.f32 %v461, 0.2
        %v567 = vmul.f32 %v463, 0.2
        %v568 = vmul.f32 %v466, 0.2
        %v569 = vmul.f32 %v468, 0.2
        %v570 = vmul.f32 %v471, 0.2
        %v571 = vmul.f32 %v473, 0.2
        %v572 = vmul.f32 %v476, 0.2
        %v573 = vmul.f32 %v478, 0.2
        %v574 = vmul.f32 %v481, 0.2
        %v575 = vmul.f32 %v483, 0.2
        %v576 = vmul.f32 %v486, 0.2
        %v577 = vmul.f32 %v488, 0.2
        %v578 = vmul.f32 %v491, 0.2
        %v579 = vmul.f32 %v493, 0.2
        %v580 = vmul.f32 %v496, 0.2
        %v581 = vmul.f32 %v498, 0.2
        %v582 = vmul.f32 %v501, 0.2
        %v583 = vmul.f32 %v503, 0.2
        %v584 = vmul.f32 %v506, 0.2
        %v585 = vmul.f32 %v508, 0.2
        %v586 = vmul.f32 %v511, 0.2
        %v587 = vmul.f32 %v513, 0.2
        %v588 = vmul.f32 %v516, 0.2
        %v589 = vmul.f32 %v518, 0.2
        %v590 = vmul.f32 %v521, 0.2
        %v591 = vmul.f32 %v523, 0.2
        %v592 = vmul.f32 %v526, 0.2
        %v593 = vmul.f32 %v528, 0.2
        %v594 = vsel %vm530, %v451, %v562
        %v595 = vsel %vm531, %v453, %v563
        %v596 = vsel %vm532, %v456, %v564
        %v597 = vsel %vm533, %v458, %v565
        %v598 = vsel %vm534, %v461, %v566
        %v599 = vsel %vm535, %v463, %v567
        %v600 = vsel %vm536, %v466, %v568
        %v601 = vsel %vm537, %v468, %v569
        %v602 = vsel %vm538, %v471, %v570
        %v603 = vsel %vm539, %v473, %v571
        %v604 = vsel %vm540, %v476, %v572
        %v605 = vsel %vm541, %v478, %v573
        %v606 = vsel %vm542, %v481, %v574
        %v607 = vsel %vm543, %v483, %v575
        %v608 = vsel %vm544, %v486, %v576
        %v609 = vsel %vm545, %v488, %v577
        %v610 = vsel %vm546, %v491, %v578
        %v611 = vsel %vm547, %v493, %v579
        %v612 = vsel %vm548, %v496, %v580
        %v613 = vsel %vm549, %v498, %v581
        %v614 = vsel %vm550, %v501, %v582
        %v615 = vsel %vm551, %v503, %v583
        %v616 = vsel %vm552, %v506, %v584
        %v617 = vsel %vm553, %v508, %v585
        %v618 = vsel %vm554, %v511, %v586
        %v619 = vsel %vm555, %v513, %v587
        %v620 = vsel %vm556, %v516, %v588
        %v621 = vsel %vm557, %v518, %v589
        %v622 = vsel %vm558, %v521, %v590
        %v623 = vsel %vm559, %v523, %v591
        %v624 = vsel %vm560, %v526, %v592
        %v625 = vsel %vm561, %v528, %v593
        %v626 = vmul.f32 %v594, 1.4142135
        %v627 = vmul.f32 %v595, 1.4142135
        %v628 = vmul.f32 %v596, 1.4142135
        %v629 = vmul.f32 %v597, 1.4142135
        %v630 = vmul.f32 %v598, 1.4142135
        %v631 = vmul.f32 %v599, 1.4142135
        %v632 = vmul.f32 %v600, 1.4142135
        %v633 = vmul.f32 %v601, 1.4142135
        %v634 = vmul.f32 %v602, 1.4142135
        %v635 = vmul.f32 %v603, 1.4142135
        %v636 = vmul.f32 %v604, 1.4142135
        %v637 = vmul.f32 %v605, 1.4142135
        %v638 = vmul.f32 %v606, 1.4142135
        %v639 = vmul.f32 %v607, 1.4142135
        %v640 = vmul.f32 %v608, 1.4142135
        %v641 = vmul.f32 %v609, 1.4142135
        %v642 = vmul.f32 %v610, 1.4142135
        %v643 = vmul.f32 %v611, 1.4142135
        %v644 = vmul.f32 %v612, 1.4142135
        %v645 = vmul.f32 %v613, 1.4142135
        %v646 = vmul.f32 %v614, 1.4142135
        %v647 = vmul.f32 %v615, 1.4142135
        %v648 = vmul.f32 %v616, 1.4142135
        %v649 = vmul.f32 %v617, 1.4142135
        %v650 = vmul.f32 %v618, 1.4142135
        %v651 = vmul.f32 %v619, 1.4142135
        %v652 = vmul.f32 %v620, 1.4142135
        %v653 = vmul.f32 %v621, 1.4142135
        %v654 = vmul.f32 %v622, 1.4142135
        %v655 = vmul.f32 %v623, 1.4142135
        %v656 = vmul.f32 %v624, 1.4142135
        %v657 = vmul.f32 %v625, 1.4142135
        %658 = vst [vmem:[%s239] sm:$0xff] %v626
        %659 = vst [vmem:[%s239 + $0x8] sm:$0xff] %v627
        %660 = vst [vmem:[%s239 + $0x10] sm:$0xff] %v628
        %661 = vst [vmem:[%s239 + $0x18] sm:$0xff] %v629
        %662 = vst [vmem:[%s239 + $0x20] sm:$0xff] %v630
        %663 = vst [vmem:[%s239 + $0x28] sm:$0xff] %v631
        %664 = vst [vmem:[%s239 + $0x30] sm:$0xff] %v632
        %665 = vst [vmem:[%s239 + $0x38] sm:$0xff] %v633
        %666 = vst [vmem:[%s239 + $0x40] sm:$0xff] %v634
        %667 = vst [vmem:[%s239 + $0x48] sm:$0xff] %v635
        %668 = vst [vmem:[%s239 + $0x50] sm:$0xff] %v636
        %669 = vst [vmem:[%s239 + $0x58] sm:$0xff] %v637
        %670 = vst [vmem:[%s239 + $0x60] sm:$0xff] %v638
        %671 = vst [vmem:[%s239 + $0x68] sm:$0xff] %v639
        %672 = vst [vmem:[%s239 + $0x70] sm:$0xff] %v640
        %673 = vst [vmem:[%s239 + $0x78] sm:$0xff] %v641
        %674 = vst [vmem:[%s239 + $0x80] sm:$0xff] %v642
        %675 = vst [vmem:[%s239 + $0x88] sm:$0xff] %v643
        %676 = vst [vmem:[%s239 + $0x90] sm:$0xff] %v644
        %677 = vst [vmem:[%s239 + $0x98] sm:$0xff] %v645
        %678 = vst [vmem:[%s239 + $0xa0] sm:$0xff] %v646
        %679 = vst [vmem:[%s239 + $0xa8] sm:$0xff] %v647
        %680 = vst [vmem:[%s239 + $0xb0] sm:$0xff] %v648
        %681 = vst [vmem:[%s239 + $0xb8] sm:$0xff] %v649
        %682 = vst [vmem:[%s239 + $0xc0] sm:$0xff] %v650
        %683 = vst [vmem:[%s239 + $0xc8] sm:$0xff] %v651
        %684 = vst [vmem:[%s239 + $0xd0] sm:$0xff] %v652
        %685 = vst [vmem:[%s239 + $0xd8] sm:$0xff] %v653
        %686 = vst [vmem:[%s239 + $0xe0] sm:$0xff] %v654
        %687 = vst [vmem:[%s239 + $0xe8] sm:$0xff] %v655
        %688 = vst [vmem:[%s239 + $0xf0] sm:$0xff] %v656
        %689 = vst [vmem:[%s239 + $0xf8] sm:$0xff] %v657
        %s690 = sand.u32 %s121, 1
        %s691 = scalar_lea.sflag [#allocation4], %s690
        %s692 = sand.u32 %s121, 1
        %s693 = smul.addr %s692, 256
        %s694 = scalar_lea.vmem [#allocation7], %s693
        // Predicated region
        $region41: #{tpu_custom_call.1} parent=31 // pred_check
          %p695 = pneg %p131
        $region42: #{tpu_custom_call.1} parent=31 // pred_check_branch
          %697 = sbr.rel (%p695) target = $region44
        $region43: #{tpu_custom_call.1} parent=31 // pred_region
          %s698 = smul.u32 32, %s25
          %700 = vsyncadd %s691, 0
          %s701 = sadd.s32 %s26, %s698
          %s702 = smul.addr %s701, 8
          %s703 = scalar_lea.hbm %s3, %s702
          %s704 = sshll.u32 %s694, 4
          %s705 = int_to_ptr.vmem [resolvable:$true] %s704
          %s706 = sshll.u32 %s703, 4
          %s707 = int_to_ptr.hbm [resolvable:$true] %s706
          %712 = dma.vmem_to_hbm [thread:$0]  %s705, 4096, %s707, %s691, 128, 128, 8
        $region44: #{tpu_custom_call.1} parent=31 // pred_fallthru
          _
      $region32: #{tpu_custom_call.1} parent=5 // pred_fallthru
        _
      %p713 = scmp.le.s32.totalorder 2, %s16
      // Predicated region
      $region45: #{tpu_custom_call.1} parent=5 // pred_check
        %p714 = pneg %p713
      $region46: #{tpu_custom_call.1} parent=5 // pred_check_branch
        %716 = sbr.rel (%p714) target = $region48
      $region47: #{tpu_custom_call.1} parent=5 // pred_region
        %s717 = ssub.s32 %s16, 2
        // Predicated region
        $region49: #{tpu_custom_call.1} parent=47 // pred_check
          %p718 = pneg %p137
        $region50: #{tpu_custom_call.1} parent=47 // pred_check_branch
          %720 = sbr.rel (%p718) target = $region52
        $region51: #{tpu_custom_call.1} parent=47 // pred_region
          %s721 = sand.u32 %s122, 1
          %s722 = scalar_lea.sflag [#allocation4], %s721
          %s723 = sand.u32 %s122, 1
          %s724 = smul.addr %s723, 256
          %s725 = scalar_lea.vmem [#allocation7], %s724
          %727 = dma.done %s722, 4096
        $region52: #{tpu_custom_call.1} parent=47 // pred_fallthru
          _
      $region48: #{tpu_custom_call.1} parent=5 // pred_fallthru
        _
    $region6: #{tpu_custom_call.1} parent=1 // loop_footer
      %s20 = sadd.s32 1, %s16
    $region7: #{tpu_custom_call.1} parent=1 // loop_footer_branch
      %15 = sbr.rel target = $region3
    $region8: #{tpu_custom_call.1} parent=1 // loop_exit
      _
    %728 = vsyncpa [#allocation3], 1
    %s729 = scalar_lea.sflag [#allocation3], 1
    %730 = vsyncpa %s729, 1
    %731 = vsyncpa [#allocation6], 1
    %732 = vsyncpa [#allocation4], 1
    %s733 = scalar_lea.sflag [#allocation4], 1
    %734 = vsyncpa %s733, 1

</llo_original>
